<compile_context>
chip_gen: v7x
topology: tpu7x:2x2x1
jax: 0.10.0
libtpu: 0.0.40
codegen_flags: <defaults>
</compile_context>

<pallas_src>
import numpy as np
import jax
import jax.numpy as jnp
from jax.experimental import pallas as pl
from jax.experimental.pallas import tpu as pltpu


def _window_cut_kernel(start_ref, ddx_ref, mdx_ref, p_ref, ddx_o, mdx_o, p_o):
    """Copy rows [s, s+W) of each input tile to the outputs.

    start_ref : (1,) int32 scalar-prefetch ref in SMEM (window start).
    ddx_ref / mdx_ref : (S, td) VMEM tiles (lane-tiled over the hidden dim).
    p_ref / p_o : small position blocks, resident across the whole grid.
    """
    s = start_ref[0]
    w = ddx_o.shape[0]                       # static windowsize
    ddx_o[...] = ddx_ref[pl.ds(s, w), :]
    mdx_o[...] = mdx_ref[pl.ds(s, w), :]

    # p is tiny and its output block is resident across the grid axis: write
    # it once on the first step, let the pipeline write it back at the end.
    @pl.when(pl.program_id(0) == 0)
    def _():
        p_o[...] = p_ref[pl.ds(s, w), :]


def _choose_lane_tile(S, W, D, itemsize, budget_bytes=8 * 1024 * 1024):
    """Lane-dense tile over the hidden dim, capped for scoped VMEM (v7x-safe)."""
    if D % 128 != 0:
        return D  # full-extent block is always legal regardless of (8,128)
    # ddx + mdx, input (S rows) + output (W rows) blocks, double-buffered.
    per_col = 2 * (S + W) * itemsize * 2
    td = (budget_bytes // max(per_col, 1)) // 128 * 128
    td = max(128, td)
    return int(min(D, td))


def window_cut(ddx, mdx, p, idx_start, windowsize):
    """Pallas equivalent of index_select of rows [idx_start, idx_start+W) on dim -2."""
    S, D = ddx.shape
    Sp, Dp = p.shape
    assert mdx.shape == (S, D), "ddx and mdx must share a shape"
    assert Sp == S, "positions must share the sequence length"
    W = int(windowsize)
    assert 0 < W <= S

    td = _choose_lane_tile(S, W, D, jnp.dtype(ddx.dtype).itemsize)
    grid = (pl.cdiv(D, td),)

    start_arr = jnp.asarray(idx_start, dtype=jnp.int32).reshape((1,))

    grid_spec = pltpu.PrefetchScalarGridSpec(
        num_scalar_prefetch=1,
        grid=grid,
        in_specs=[
            pl.BlockSpec((S, td), lambda i, start: (0, i)),    # ddx tile
            pl.BlockSpec((S, td), lambda i, start: (0, i)),    # mdx tile
            pl.BlockSpec((Sp, Dp), lambda i, start: (0, 0)),   # p (resident)
        ],
        out_specs=[
            pl.BlockSpec((W, td), lambda i, start: (0, i)),
            pl.BlockSpec((W, td), lambda i, start: (0, i)),
            pl.BlockSpec((W, Dp), lambda i, start: (0, 0)),    # p window (resident)
        ],
    )

    out_shapes = (
        jax.ShapeDtypeStruct((W, D), ddx.dtype),
        jax.ShapeDtypeStruct((W, D), mdx.dtype),
        jax.ShapeDtypeStruct((W, Dp), p.dtype),
    )

    return pl.pallas_call(
        _window_cut_kernel,
        out_shape=out_shapes,
        grid_spec=grid_spec,
        compiler_params=pltpu.CompilerParams(
            # The p output block is revisited across the grid axis, so the axis
            # must stay sequential ("arbitrary") to be safe on 2-TC chips (v7x).
            dimension_semantics=("arbitrary",),
        ),
    )(start_arr, ddx, mdx, p)


def window_cutter_forward(ddx, mdx, p, props=None, *, windowsize=12,
                          keep_properties=False, idx_start=None, key=None):
    """Mirror of WindowCutter.forward for 2-D [seq, dim] token sequences."""
    S = ddx.shape[-2]
    if S == windowsize:
        start = 0
    elif idx_start is not None:
        start = idx_start
    else:
        # JAX-side randomness stands in for python random.randint (inclusive
        # upper bound) — the random draw is not part of the kernel.
        if key is None:
            key = jax.random.PRNGKey(0)
        start = jax.random.randint(key, (), 0, S - windowsize + 1, dtype=jnp.int32)

    ddx_o, mdx_o, p_o = window_cut(ddx, mdx, p, start, windowsize)
    if keep_properties:
        # props is a pure pass-through in the module: return it untouched
        # (no device copy — strictly cheaper than any kernel).
        return ddx_o, mdx_o, p_o, props
    return ddx_o, mdx_o, p_o


if __name__ == "__main__":
    key = jax.random.PRNGKey(0)
    k1, k2, k3, k4, k5 = jax.random.split(key, 5)

    S, D, Dp = 32, 128, 8
    windowsize = 12

    ddx = jax.random.normal(k1, (S, D), dtype=jnp.float32)
    mdx = jax.random.normal(k2, (S, D), dtype=jnp.float32)
    p = jax.random.normal(k3, (S, Dp), dtype=jnp.float32)
    props = jax.random.normal(k4, (4,), dtype=jnp.float32)

    # Deterministic "random" window start (mirrors random.randint(0, S - W)).
    idx_start = int(jax.random.randint(k5, (), 0, S - windowsize + 1))

    ddx_o, mdx_o, p_o, props_o = window_cutter_forward(
        ddx, mdx, p, props, windowsize=windowsize, keep_properties=True,
        idx_start=idx_start)
    jax.block_until_ready((ddx_o, mdx_o, p_o))

    # Reference: torch.index_select(x, -2, arange(start, start+W)) == contiguous slice.
    ddx_ref = ddx[idx_start:idx_start + windowsize, :]
    mdx_ref = mdx[idx_start:idx_start + windowsize, :]
    p_ref = p[idx_start:idx_start + windowsize, :]

    assert ddx_o.shape == (windowsize, D) and ddx_o.dtype == jnp.float32
    assert mdx_o.shape == (windowsize, D) and mdx_o.dtype == jnp.float32
    assert p_o.shape == (windowsize, Dp) and p_o.dtype == jnp.float32

    # Single batched host transfer for verification.
    got = jax.device_get((ddx_o, mdx_o, p_o, ddx_ref, mdx_ref, p_ref, props_o, props))
    np.testing.assert_array_equal(got[0], got[3])
    np.testing.assert_array_equal(got[1], got[4])
    np.testing.assert_array_equal(got[2], got[5])
    np.testing.assert_array_equal(got[6], got[7])

    # Also exercise the max_len == windowsize branch (idx_start forced to 0).
    ddx2, mdx2, p2 = window_cutter_forward(
        ddx[:windowsize], mdx[:windowsize], p[:windowsize], windowsize=windowsize)
    jax.block_until_ready((ddx2, mdx2, p2))
    got2 = jax.device_get((ddx2, mdx2, p2,
                           ddx[:windowsize], mdx[:windowsize], p[:windowsize]))
    np.testing.assert_array_equal(got2[0], got2[3])
    np.testing.assert_array_equal(got2[1], got2[4])
    np.testing.assert_array_equal(got2[2], got2[5])

    # TODO(synk): leading batch dims (ndim > 2) would need an extra grid axis;
    # the module's dataset use-case operates on per-sample [seq, dim] tensors.
    print("KERNEL_OK")
</pallas_src>

<mosaic_0001>
module attributes {stable_mosaic.version = 11 : i64} {
  func.func @_window_cut_kernel(%arg0: i32, %arg1: memref<1xi32, #tpu.memory_space<smem>>, %arg2: memref<32x128xf32, #tpu.memory_space<vmem>>, %arg3: memref<32x128xf32, #tpu.memory_space<vmem>>, %arg4: memref<32x8xf32, #tpu.memory_space<vmem>>, %arg5: memref<12x128xf32, #tpu.memory_space<vmem>>, %arg6: memref<12x128xf32, #tpu.memory_space<vmem>>, %arg7: memref<12x8xf32, #tpu.memory_space<vmem>>) attributes {dimension_semantics = [#tpu.dimension_semantics<arbitrary>], iteration_bounds = array<i64: 1>, scalar_prefetch = 1 : i64, scratch_operands = 0 : i64, tpu.core_type = #tpu.core_type<tc>, window_params = [{transform_indices = @transform_0, window_bounds = array<i64: 32, 128>}, {transform_indices = @transform_1, window_bounds = array<i64: 32, 128>}, {pipeline_mode = #tpu.pipeline_mode<synchronous>, transform_indices = @transform_2, window_bounds = array<i64: 32, 8>}, {transform_indices = @transform_3, window_bounds = array<i64: 12, 128>}, {transform_indices = @transform_4, window_bounds = array<i64: 12, 128>}, {pipeline_mode = #tpu.pipeline_mode<synchronous>, transform_indices = @transform_5, window_bounds = array<i64: 12, 8>}]} {
    %c0 = arith.constant 0 : index
    %0 = memref.load %arg1[%c0] : memref<1xi32, #tpu.memory_space<smem>>
    %1 = arith.index_cast %0 : i32 to index
    %c0_0 = arith.constant 0 : index
    %2 = vector.load %arg2[%1, %c0_0] : memref<32x128xf32, #tpu.memory_space<vmem>>, vector<12x128xf32>
    %c0_1 = arith.constant 0 : index
    %c0_2 = arith.constant 0 : index
    %3 = vector.load %arg5[%c0_1, %c0_2] : memref<12x128xf32, #tpu.memory_space<vmem>>, vector<12x128xf32>
    tpu.vector_store %arg5[%c0_1, %c0_2], %2 {strides = array<i32>} : memref<12x128xf32, #tpu.memory_space<vmem>>, vector<12x128xf32>,
    %4 = arith.index_cast %0 : i32 to index
    %c0_3 = arith.constant 0 : index
    %5 = vector.load %arg3[%4, %c0_3] : memref<32x128xf32, #tpu.memory_space<vmem>>, vector<12x128xf32>
    %c0_4 = arith.constant 0 : index
    %c0_5 = arith.constant 0 : index
    %6 = vector.load %arg6[%c0_4, %c0_5] : memref<12x128xf32, #tpu.memory_space<vmem>>, vector<12x128xf32>
    tpu.vector_store %arg6[%c0_4, %c0_5], %5 {strides = array<i32>} : memref<12x128xf32, #tpu.memory_space<vmem>>, vector<12x128xf32>,
    %c0_i32 = arith.constant 0 : i32
    %7 = arith.cmpi eq, %arg0, %c0_i32 : i32
    %8 = arith.extui %7 : i1 to i32
    %c0_i32_6 = arith.constant 0 : i32
    %9 = arith.cmpi ne, %8, %c0_i32_6 : i32
    scf.if %9 {
      %10 = arith.index_cast %0 : i32 to index
      %c0_7 = arith.constant 0 : index
      %11 = vector.load %arg4[%10, %c0_7] : memref<32x8xf32, #tpu.memory_space<vmem>>, vector<12x8xf32>
      %c0_8 = arith.constant 0 : index
      %c0_9 = arith.constant 0 : index
      %12 = vector.load %arg7[%c0_8, %c0_9] : memref<12x8xf32, #tpu.memory_space<vmem>>, vector<12x8xf32>
      tpu.vector_store %arg7[%c0_8, %c0_9], %11 {strides = array<i32>} : memref<12x8xf32, #tpu.memory_space<vmem>>, vector<12x8xf32>,
    } else {
    }
    return
  }
  func.func @transform_0(%arg0: i32, %arg1: memref<1xi32, #tpu.memory_space<smem>>) -> (i32, i32) {
    %c0_i32 = arith.constant 0 : i32
    %c0_i32_0 = arith.constant 0 : i32
    return %c0_i32, %arg0 : i32, i32
  }
  func.func @transform_1(%arg0: i32, %arg1: memref<1xi32, #tpu.memory_space<smem>>) -> (i32, i32) {
    %c0_i32 = arith.constant 0 : i32
    %c0_i32_0 = arith.constant 0 : i32
    return %c0_i32, %arg0 : i32, i32
  }
  func.func @transform_2(%arg0: i32, %arg1: memref<1xi32, #tpu.memory_space<smem>>) -> (i32, i32) {
    %c0_i32 = arith.constant 0 : i32
    %c0_i32_0 = arith.constant 0 : i32
    %c0_i32_1 = arith.constant 0 : i32
    return %c0_i32, %c0_i32_0 : i32, i32
  }
  func.func @transform_3(%arg0: i32, %arg1: memref<1xi32, #tpu.memory_space<smem>>) -> (i32, i32) {
    %c0_i32 = arith.constant 0 : i32
    %c0_i32_0 = arith.constant 0 : i32
    return %c0_i32, %arg0 : i32, i32
  }
  func.func @transform_4(%arg0: i32, %arg1: memref<1xi32, #tpu.memory_space<smem>>) -> (i32, i32) {
    %c0_i32 = arith.constant 0 : i32
    %c0_i32_0 = arith.constant 0 : i32
    return %c0_i32, %arg0 : i32, i32
  }
  func.func @transform_5(%arg0: i32, %arg1: memref<1xi32, #tpu.memory_space<smem>>) -> (i32, i32) {
    %c0_i32 = arith.constant 0 : i32
    %c0_i32_0 = arith.constant 0 : i32
    %c0_i32_1 = arith.constant 0 : i32
    return %c0_i32, %c0_i32_0 : i32, i32
  }
}

</mosaic_0001>

<llo_original>
// kernel: tpu_custom_call.1
$region0: #{tpu_custom_call.1}
  #allocation0 [shape = 'u32[]', space=smem, size = 0x4, offset = 0x4, fixed_abs, tag = 'smem constant byte address 0x4 - core index']
  #allocation1 [shape = 'u32[144,128]{1,0:T(1,128)}', space=vmem, size = 0x12000, scoped, tag = 'internal scratch']
  #allocation2 [shape = 's32[1]{0}', space=sflag, size = 0x4, scoped, tag = 'scoped memory for tpu_custom_call.1']
  #allocation3 [shape = 's32[1]{0:T(128)S(6)}', space=smem, size = 0x200, scoped, tag = 'prefetched SMEM operand 0']
  %s0 = inlined_call_operand.<no memory space> [shape: s32[1], index: 0, kind: input, shape index: {}]
  %s1 = inlined_call_operand.vmem [shape: f32[32,128], index: 1, kind: input, shape index: {}]
  %s2 = inlined_call_operand.hbm [shape: f32[32,128], index: 2, kind: input, shape index: {}]
  %s3 = inlined_call_operand.vmem [shape: f32[32,8], index: 3, kind: input, shape index: {}]
  %s4 = inlined_call_operand.hbm [shape: f32[12,128], index: 4, kind: output, shape index: {0}]
  %s5 = inlined_call_operand.hbm [shape: f32[12,128], index: 5, kind: output, shape index: {1}]
  %s6 = inlined_call_operand.vmem [shape: f32[12,8], index: 6, kind: output, shape index: {2}]
  %7 = xla_tuple %s4, %s5, %s6
  %s8 = sld [smem:[#allocation0]]
  $region46: #{tpu_custom_call.1} parent=0
    _
  %s10 = ssub.s32 1, %s8
  %s11 = scalar_select 0, %s10, %s8
  %12 = sst [smem:[#allocation3]] %s0
  $region1: #{tpu_custom_call.1} parent=0
    #allocation4 [shape = 'u8[16384]{0}', space=vmem, size = 0x4000, scoped, tag = 'input window, operand 2, single buffered']
    #allocation5 [shape = 's32[1]{0}', space=sflag, size = 0x4, scoped, tag = 'scoped memory for tpu_custom_call.1']
    #allocation6 [shape = 's32[1]{0}', space=sflag, size = 0x4, scoped, tag = 'scoped memory for tpu_custom_call.1']
    #allocation7 [shape = 'u8[8192]{0}', space=vmem, size = 0x2000, scoped, tag = 'output window, operand 0, single buffered']
    #allocation8 [shape = 'u8[8192]{0}', space=vmem, size = 0x2000, scoped, tag = 'output window, operand 1, single buffered']
    #allocation9 [shape = 's32[1]{0}', space=sflag, size = 0x4, scoped, tag = 'scoped memory for tpu_custom_call.1']
    %13 = vsyncpa [#allocation5], 0
    %14 = vsyncpa [#allocation6], 0
    %15 = vsyncpa [#allocation9], 0
    // Predicated region
    $region2: #{tpu_custom_call.1} parent=1 // pred_check
      _
    $region3: #{tpu_custom_call.1} parent=1 // pred_check_branch
      %17 = sbr.rel (0) target = $region5
    $region4: #{tpu_custom_call.1} parent=1 // pred_region
      _
    $region5: #{tpu_custom_call.1} parent=1 // pred_fallthru
      _
    // Predicated region
    $region6: #{tpu_custom_call.1} parent=1 // pred_check
      _
    $region7: #{tpu_custom_call.1} parent=1 // pred_check_branch
      %19 = sbr.rel (0) target = $region9
    $region8: #{tpu_custom_call.1} parent=1 // pred_region
      %s21 = ssub.s32 512, 512
      %22 = vsyncadd [#allocation5], %s21
      %s23 = sshll.u32 [#allocation4], 4
      %s24 = int_to_ptr.vmem [resolvable:$true] %s23
      %29 = dma.hbm_to_vmem [thread:$0]  %s2, 512, %s24, [#allocation5], 128, 128, 8
    $region9: #{tpu_custom_call.1} parent=1 // pred_fallthru
      _
    // Predicated region
    $region10: #{tpu_custom_call.1} parent=1 // pred_check
      _
    $region11: #{tpu_custom_call.1} parent=1 // pred_check_branch
      %31 = sbr.rel (0) target = $region13
    $region12: #{tpu_custom_call.1} parent=1 // pred_region
      _
    $region13: #{tpu_custom_call.1} parent=1 // pred_fallthru
      _
    // Predicated region
    $region14: #{tpu_custom_call.1} parent=1 // pred_check
      _
    $region15: #{tpu_custom_call.1} parent=1 // pred_check_branch
      %33 = sbr.rel (0) target = $region17
    $region16: #{tpu_custom_call.1} parent=1 // pred_region
      %34 = dma.done [#allocation5], 512
    $region17: #{tpu_custom_call.1} parent=1 // pred_fallthru
      _
    %s35 = sld [smem:[#allocation3]]
    %s36 = scalar_lea.vmem %s1, %s35
    %v37 = vld [vmem:[%s36] sm:$0xff]
    %v38 = vld [vmem:[%s36 + $0x8] sm:$0xf]
    %39 = vst [vmem:[#allocation7] sm:$0xff] %v37
    %40 = vst [vmem:[#allocation7 + $0x8] sm:$0xf] %v38
    %s41 = scalar_lea.vmem [#allocation4], %s35
    %v42 = vld [vmem:[%s41] sm:$0xff]
    %v43 = vld [vmem:[%s41 + $0x8] sm:$0xf]
    %44 = vst [vmem:[#allocation8] sm:$0xff] %v42
    %45 = vst [vmem:[#allocation8 + $0x8] sm:$0xf] %v43
    %p46 = scmp.eq.s32.totalorder 0, 0
    // Predicated region
    $region18: #{tpu_custom_call.1} parent=1 // pred_check
      %p47 = pneg %p46
    $region19: #{tpu_custom_call.1} parent=1 // pred_check_branch
      %49 = sbr.rel (%p47) target = $region21
    $region20: #{tpu_custom_call.1} parent=1 // pred_region
      %s50 = scalar_lea.vmem %s3, %s35
      %v51 = vld [vmem:[%s50] sm:$0xff]
      %v52 = vld [vmem:[%s50 + $0x8] sm:$0xf]
      %vm53 = vcmask 64512
      %54 = vst.msk [vmem:[%s6] sm:$0xff] %vm53, %v51
      %vm55 = vcmask 60416
      %56 = vst.msk [vmem:[%s6 + $0x8] sm:$0xf] %vm55, %v52
    $region21: #{tpu_custom_call.1} parent=1 // pred_fallthru
      _
    // Predicated region
    $region22: #{tpu_custom_call.1} parent=1 // pred_check
      _
    $region23: #{tpu_custom_call.1} parent=1 // pred_check_branch
      %58 = sbr.rel (0) target = $region25
    $region24: #{tpu_custom_call.1} parent=1 // pred_region
      %s60 = ssub.s32 256, 256
      %61 = vsyncadd [#allocation6], %s60
      %s62 = sshll.u32 [#allocation7], 4
      %s63 = int_to_ptr.vmem [resolvable:$true] %s62
      %68 = dma.vmem_to_hbm [thread:$0]  %s63, 256, %s4, [#allocation6], 128, 128, 8
    $region25: #{tpu_custom_call.1} parent=1 // pred_fallthru
      _
    // Predicated region
    $region26: #{tpu_custom_call.1} parent=1 // pred_check
      _
    $region27: #{tpu_custom_call.1} parent=1 // pred_check_branch
      %70 = sbr.rel (0) target = $region29
    $region28: #{tpu_custom_call.1} parent=1 // pred_region
      %s72 = ssub.s32 256, 256
      %73 = vsyncadd [#allocation9], %s72
      %s74 = sshll.u32 [#allocation8], 4
      %s75 = int_to_ptr.vmem [resolvable:$true] %s74
      %80 = dma.vmem_to_hbm [thread:$0]  %s75, 256, %s5, [#allocation9], 128, 128, 8
    $region29: #{tpu_custom_call.1} parent=1 // pred_fallthru
      _
    // Predicated region
    $region30: #{tpu_custom_call.1} parent=1 // pred_check
      _
    $region31: #{tpu_custom_call.1} parent=1 // pred_check_branch
      %82 = sbr.rel (0) target = $region33
    $region32: #{tpu_custom_call.1} parent=1 // pred_region
      _
    $region33: #{tpu_custom_call.1} parent=1 // pred_fallthru
      _
    // Predicated region
    $region34: #{tpu_custom_call.1} parent=1 // pred_check
      _
    $region35: #{tpu_custom_call.1} parent=1 // pred_check_branch
      %84 = sbr.rel (0) target = $region37
    $region36: #{tpu_custom_call.1} parent=1 // pred_region
      %85 = dma.done [#allocation6], 256
    $region37: #{tpu_custom_call.1} parent=1 // pred_fallthru
      _
    // Predicated region
    $region38: #{tpu_custom_call.1} parent=1 // pred_check
      _
    $region39: #{tpu_custom_call.1} parent=1 // pred_check_branch
      %87 = sbr.rel (0) target = $region41
    $region40: #{tpu_custom_call.1} parent=1 // pred_region
      %88 = dma.done [#allocation9], 256
    $region41: #{tpu_custom_call.1} parent=1 // pred_fallthru
      _
    // Predicated region
    $region42: #{tpu_custom_call.1} parent=1 // pred_check
      _
    $region43: #{tpu_custom_call.1} parent=1 // pred_check_branch
      %90 = sbr.rel (0) target = $region45
    $region44: #{tpu_custom_call.1} parent=1 // pred_region
      _
    $region45: #{tpu_custom_call.1} parent=1 // pred_fallthru
      _
    %91 = vsyncpa [#allocation5], 1
    %92 = vsyncpa [#allocation6], 1
    %93 = vsyncpa [#allocation9], 1

</llo_original>
